<compile_context>
chip_gen: v5e
topology: v5e:2x2
jax: 0.10.0
libtpu: 0.0.40
codegen_flags: <defaults>
</compile_context>

<pallas_src>
import functools

import jax
import jax.numpy as jnp
from jax.experimental import pallas as pl
from jax.experimental.pallas import tpu as pltpu


def _round_up(x, mult):
    return ((x + mult - 1) // mult) * mult


def _amsoftmax_kernel(costh_ref, lb_ref, out_ref,
                      m_scr, l_scr, sum_scr, tgt_scr,
                      *, margin, scale, smooth, num_classes, needs_mask):
    # costh_ref: (TN, TC) input tile (native dtype), lb_ref: (TN, 1) int32,
    # out_ref:   (TN, 1) per-sample loss (written once, on the last class tile)
    # scratch:   (TN, 1) f32 running max / sumexp / rowsum(costh) / costh[target]
    k = pl.program_id(1)
    nk = pl.num_programs(1)

    @pl.when(k == 0)
    def _init():
        m_scr[...] = jnp.full_like(m_scr, -jnp.inf)
        l_scr[...] = jnp.zeros_like(l_scr)
        sum_scr[...] = jnp.zeros_like(sum_scr)
        tgt_scr[...] = jnp.zeros_like(tgt_scr)

    x = costh_ref[...].astype(jnp.float32)            # upcast per tile (bf16 on the wire OK)
    lb = lb_ref[...]                                  # (TN, 1) int32
    tn, tc = x.shape
    sm = scale * margin                               # python float

    # Local one-hot: compare local column iota against (lb - k*TC); rows whose
    # target falls outside this tile simply never match.  No global class ids.
    local_ids = jax.lax.broadcasted_iota(jnp.int32, (tn, tc), 1)
    onehot = local_ids == (lb - k * tc)               # (TN, TC) bool

    base = scale * x
    logits = jnp.where(onehot, base - sm, base)       # single select, no one-hot cast

    def _lse_update(logits_for_lse):
        tile_max = jnp.max(logits_for_lse, axis=-1, keepdims=True)   # (TN, 1)
        m_new = jnp.maximum(m_scr[...], tile_max)
        # exp(-inf - m_new) == 0, so no extra masking of p is needed.
        p = jnp.exp(logits_for_lse - m_new)
        l_scr[...] = jnp.exp(m_scr[...] - m_new) * l_scr[...] + jnp.sum(p, axis=-1, keepdims=True)
        m_scr[...] = m_new

    if needs_mask:
        is_last = k == nk - 1

        @pl.when(jnp.logical_not(is_last))
        def _fast():
            _lse_update(logits)

        @pl.when(is_last)
        def _masked():
            # Padded class columns only ever appear in the last class tile;
            # at least one valid column is guaranteed (C_pad - C < TC).
            valid = local_ids < (num_classes - k * tc)
            _lse_update(jnp.where(valid, logits, -jnp.inf))
    else:
        _lse_update(logits)

    # Label-smoothing rowsum: raw costh rowsum (padded columns are exactly zero
    # by construction in the wrapper, so no valid-mask pass is needed).
    sum_scr[...] += jnp.sum(x, axis=-1, keepdims=True)
    # Target cosine (exactly one matching column across all class tiles).
    tgt_scr[...] += jnp.sum(jnp.where(onehot, x, 0.0), axis=-1, keepdims=True)

    @pl.when(k == nk - 1)
    def _finalize():
        lse = m_scr[...] + jnp.log(l_scr[...])                    # (TN, 1)
        # rowsum(logits over valid classes) = s*rowsum(costh) - s*m  (margin hits one column)
        rowsum_logits = scale * sum_scr[...] - sm
        tgt_logit = scale * tgt_scr[...] - sm
        qx = (smooth / num_classes) * rowsum_logits + (1.0 - smooth) * tgt_logit
        out_ref[...] = lse - qx                                   # per-sample CE w/ label smoothing


def amsoftmax_loss(costh, lb, *, m=0.35, s=30.0, smooth_label=0.1,
                   tn_max=256, tc_max=8192):
    """costh: (N, C) cosine similarities (f32 or bf16); lb: (N,) int class labels."""
    N, C = costh.shape
    itemsize = jnp.dtype(costh.dtype).itemsize

    # Batch tile: aim for >=4 batch tiles when the batch allows, so the
    # "parallel" batch axis can actually shard across v7x's two TensorCores.
    TN = min(tn_max, max(8, _round_up((N + 3) // 4, 8)))
    N_pad = _round_up(N, TN)

    # Class tile: lane-dense (multiple of 128), as large as fits with
    # double-buffering headroom (<= 12 MiB per buffer -> 24 MiB double-buffered,
    # comfortable inside v7x's 64 MiB per-TC VMEM).
    TC = min(tc_max, _round_up(C, 128))
    max_tile_bytes = 12 * 1024 * 1024
    while TN * TC * itemsize > max_tile_bytes and TC > 128:
        TC = _round_up(TC // 2, 128)
    C_pad = _round_up(C, TC)

    if N_pad != N or C_pad != C:
        # Pad with zeros: padded class columns MUST be exactly zero (rowsum fold).
        costh = jnp.pad(costh, ((0, N_pad - N), (0, C_pad - C)))
    lb2 = lb.astype(jnp.int32).reshape(-1, 1)
    if N_pad != N:
        lb2 = jnp.pad(lb2, ((0, N_pad - N), (0, 0)))

    grid = (N_pad // TN, C_pad // TC)          # reduction (class) axis last
    needs_mask = (C_pad != C)                  # statically known -> fast path when False

    kernel = functools.partial(
        _amsoftmax_kernel,
        margin=float(m), scale=float(s), smooth=float(smooth_label),
        num_classes=int(C), needs_mask=bool(needs_mask),
    )

    tile_bytes = TN * TC * itemsize
    vmem_limit = int(min(max(4 * tile_bytes, 32 * 1024 * 1024), 48 * 1024 * 1024))

    bytes_in = N_pad * C_pad * itemsize + N_pad * 4
    per_sample = pl.pallas_call(
        kernel,
        out_shape=jax.ShapeDtypeStruct((N_pad, 1), jnp.float32),
        grid_spec=pltpu.PrefetchScalarGridSpec(
            num_scalar_prefetch=0,
            grid=grid,
            in_specs=[
                pl.BlockSpec((TN, TC), lambda i, k: (i, k)),
                pl.BlockSpec((TN, 1), lambda i, k: (i, 0)),
            ],
            out_specs=pl.BlockSpec((TN, 1), lambda i, k: (i, 0)),
            scratch_shapes=[pltpu.VMEM((TN, 1), jnp.float32)] * 4,
        ),
        compiler_params=pltpu.CompilerParams(
            dimension_semantics=("parallel", "arbitrary"),
            vmem_limit_bytes=vmem_limit,
        ),
        cost_estimate=pl.CostEstimate(
            flops=int(8 * N_pad * C_pad),
            transcendentals=int(N_pad * C_pad),
            bytes_accessed=int(bytes_in + N_pad * 4),
        ),
    )(costh, lb2)

    # Mean over the *true* batch only (ragged last batch tile handled here).
    return jnp.sum(per_sample[:N, 0]) / N


def _reference(costh, lb, m=0.35, s=30.0, smooth=0.1):
    costh = costh.astype(jnp.float32)
    N, C = costh.shape
    onehot = jax.nn.one_hot(lb, C, dtype=jnp.float32)
    logits = s * (costh - m * onehot)
    logp = jax.nn.log_softmax(logits, axis=-1)
    q = smooth / C + (1.0 - smooth) * onehot
    return jnp.mean(-jnp.sum(q * logp, axis=-1))


if __name__ == "__main__":
    key = jax.random.PRNGKey(0)

    # Small case consistent with the module: batch=8 samples, 32 classes
    # (single tile, C % TC == 0 -> mask-free fast path).
    k1, k2 = jax.random.split(key)
    N, C = 8, 32
    costh = jnp.tanh(jax.random.normal(k1, (N, C), dtype=jnp.float32))
    lb = jax.random.randint(k2, (N,), 0, C, dtype=jnp.int32)
    loss = jax.block_until_ready(amsoftmax_loss(costh, lb))
    ref = _reference(costh, lb)
    assert jnp.allclose(loss, ref, atol=1e-4, rtol=1e-4), (loss, ref)

    # Ragged case: non-multiples of 8/128 -> padded rows + masked last class tile.
    k3, k4 = jax.random.split(k2)
    N2, C2 = 24, 300
    costh2 = jnp.tanh(jax.random.normal(k3, (N2, C2), dtype=jnp.float32))
    lb2 = jax.random.randint(k4, (N2,), 0, C2, dtype=jnp.int32)
    loss2 = jax.block_until_ready(amsoftmax_loss(costh2, lb2, tc_max=128))
    ref2 = _reference(costh2, lb2)
    assert jnp.allclose(loss2, ref2, atol=1e-4, rtol=1e-4), (loss2, ref2)

    # Multi-tile class axis with C % TC == 0 -> exercises the unmasked multi-step path.
    k5, k6 = jax.random.split(k4)
    N3, C3 = 16, 256
    costh3 = jnp.tanh(jax.random.normal(k5, (N3, C3), dtype=jnp.float32))
    lb3 = jax.random.randint(k6, (N3,), 0, C3, dtype=jnp.int32)
    loss3 = jax.block_until_ready(amsoftmax_loss(costh3, lb3, tc_max=128))
    ref3 = _reference(costh3, lb3)
    assert jnp.allclose(loss3, ref3, atol=1e-4, rtol=1e-4), (loss3, ref3)

    print("KERNEL_OK")
</pallas_src>

<mosaic_0001>
module attributes {stable_mosaic.version = 11 : i64} {
  func.func @_amsoftmax_kernel(%arg0: i32, %arg1: i32, %arg2: memref<8x128xf32, #tpu.memory_space<vmem>>, %arg3: memref<8x1xi32, #tpu.memory_space<vmem>>, %arg4: memref<8x1xf32, #tpu.memory_space<vmem>>, %arg5: memref<8x1xf32, #tpu.memory_space<vmem>>, %arg6: memref<8x1xf32, #tpu.memory_space<vmem>>, %arg7: memref<8x1xf32, #tpu.memory_space<vmem>>, %arg8: memref<8x1xf32, #tpu.memory_space<vmem>>) attributes {dimension_semantics = [#tpu.dimension_semantics<parallel>, #tpu.dimension_semantics<arbitrary>], iteration_bounds = array<i64: 1, 1>, scalar_prefetch = 0 : i64, scratch_operands = 4 : i64, tpu.core_type = #tpu.core_type<tc>, window_params = [{transform_indices = @transform_0, window_bounds = array<i64: 8, 128>}, {transform_indices = @transform_1, window_bounds = array<i64: 8, 1>}, {transform_indices = @transform_2, window_bounds = array<i64: 8, 1>}]} {
    %c0_i32 = arith.constant 0 : i32
    %0 = arith.cmpi eq, %arg1, %c0_i32 : i32
    %1 = arith.extui %0 : i1 to i32
    %c0_i32_0 = arith.constant 0 : i32
    %2 = arith.cmpi ne, %1, %c0_i32_0 : i32
    scf.if %2 {
      %cst_21 = arith.constant 0xFF800000 : f32
      %37 = vector.broadcast %cst_21 : f32 to vector<8x1xf32>
      %c0_22 = arith.constant 0 : index
      %c0_23 = arith.constant 0 : index
      %38 = vector.load %arg5[%c0_22, %c0_23] : memref<8x1xf32, #tpu.memory_space<vmem>>, vector<8x1xf32>
      tpu.vector_store %arg5[%c0_22, %c0_23], %37 {strides = array<i32>} : memref<8x1xf32, #tpu.memory_space<vmem>>, vector<8x1xf32>,
      %cst_24 = arith.constant 0.000000e+00 : f32
      %39 = vector.broadcast %cst_24 : f32 to vector<8x1xf32>
      %c0_25 = arith.constant 0 : index
      %c0_26 = arith.constant 0 : index
      %40 = vector.load %arg6[%c0_25, %c0_26] : memref<8x1xf32, #tpu.memory_space<vmem>>, vector<8x1xf32>
      tpu.vector_store %arg6[%c0_25, %c0_26], %39 {strides = array<i32>} : memref<8x1xf32, #tpu.memory_space<vmem>>, vector<8x1xf32>,
      %cst_27 = arith.constant 0.000000e+00 : f32
      %41 = vector.broadcast %cst_27 : f32 to vector<8x1xf32>
      %c0_28 = arith.constant 0 : index
      %c0_29 = arith.constant 0 : index
      %42 = vector.load %arg7[%c0_28, %c0_29] : memref<8x1xf32, #tpu.memory_space<vmem>>, vector<8x1xf32>
      tpu.vector_store %arg7[%c0_28, %c0_29], %41 {strides = array<i32>} : memref<8x1xf32, #tpu.memory_space<vmem>>, vector<8x1xf32>,
      %cst_30 = arith.constant 0.000000e+00 : f32
      %43 = vector.broadcast %cst_30 : f32 to vector<8x1xf32>
      %c0_31 = arith.constant 0 : index
      %c0_32 = arith.constant 0 : index
      %44 = vector.load %arg8[%c0_31, %c0_32] : memref<8x1xf32, #tpu.memory_space<vmem>>, vector<8x1xf32>
      tpu.vector_store %arg8[%c0_31, %c0_32], %43 {strides = array<i32>} : memref<8x1xf32, #tpu.memory_space<vmem>>, vector<8x1xf32>,
    } else {
    }
    %c0 = arith.constant 0 : index
    %c0_1 = arith.constant 0 : index
    %3 = vector.load %arg2[%c0, %c0_1] : memref<8x128xf32, #tpu.memory_space<vmem>>, vector<8x128xf32>
    %c0_2 = arith.constant 0 : index
    %c0_3 = arith.constant 0 : index
    %4 = vector.load %arg3[%c0_2, %c0_3] : memref<8x1xi32, #tpu.memory_space<vmem>>, vector<8x1xi32>
    %5 = tpu.iota {dimensions = array<i32: 1>} : vector<8x128xi32>
    %c128_i32 = arith.constant 128 : i32
    %6 = arith.muli %arg1, %c128_i32 : i32
    %7 = vector.broadcast %6 : i32 to vector<8x1xi32>
    %8 = arith.subi %4, %7 : vector<8x1xi32>
    %9 = vector.broadcast %8 : vector<8x1xi32> to vector<8x128xi32>
    %10 = arith.cmpi eq, %5, %9 : vector<8x128xi32>
    %cst = arith.constant 3.000000e+01 : f32
    %11 = vector.broadcast %cst : f32 to vector<8x128xf32>
    %12 = arith.mulf %11, %3 : vector<8x128xf32>
    %cst_4 = arith.constant 1.050000e+01 : f32
    %13 = vector.broadcast %cst_4 : f32 to vector<8x128xf32>
    %14 = arith.subf %12, %13 : vector<8x128xf32>
    %15 = arith.select %10, %14, %12 : vector<8x128xi1>, vector<8x128xf32>
    %c0_i32_5 = arith.constant 0 : i32
    %16 = arith.cmpi eq, %arg1, %c0_i32_5 : i32
    %true = arith.constant true
    %17 = arith.xori %16, %true : i1
    %18 = arith.extui %17 : i1 to i32
    %c0_i32_6 = arith.constant 0 : i32
    %19 = arith.cmpi ne, %18, %c0_i32_6 : i32
    scf.if %19 {
      %cst_21 = arith.constant dense<0xFF800000> : vector<8xf32>
      %37 = vector.multi_reduction <maximumf>, %15, %cst_21 [1] : vector<8x128xf32> to vector<8xf32>
      %38 = vector.shape_cast %37 : vector<8xf32> to vector<8x1xf32>
      %c0_22 = arith.constant 0 : index
      %c0_23 = arith.constant 0 : index
      %39 = vector.load %arg5[%c0_22, %c0_23] : memref<8x1xf32, #tpu.memory_space<vmem>>, vector<8x1xf32>
      %40 = arith.maximumf %39, %38 : vector<8x1xf32>
      %41 = vector.broadcast %40 : vector<8x1xf32> to vector<8x128xf32>
      %42 = arith.subf %15, %41 : vector<8x128xf32>
      %43 = math.exp %42 : vector<8x128xf32>
      %c0_24 = arith.constant 0 : index
      %c0_25 = arith.constant 0 : index
      %44 = vector.load %arg5[%c0_24, %c0_25] : memref<8x1xf32, #tpu.memory_space<vmem>>, vector<8x1xf32>
      %45 = arith.subf %44, %40 : vector<8x1xf32>
      %46 = math.exp %45 : vector<8x1xf32>
      %c0_26 = arith.constant 0 : index
      %c0_27 = arith.constant 0 : index
      %47 = vector.load %arg6[%c0_26, %c0_27] : memref<8x1xf32, #tpu.memory_space<vmem>>, vector<8x1xf32>
      %48 = arith.mulf %46, %47 : vector<8x1xf32>
      %cst_28 = arith.constant dense<0.000000e+00> : vector<8xf32>
      %49 = vector.multi_reduction <add>, %43, %cst_28 [1] : vector<8x128xf32> to vector<8xf32>
      %50 = vector.shape_cast %49 : vector<8xf32> to vector<8x1xf32>
      %51 = arith.addf %48, %50 : vector<8x1xf32>
      %c0_29 = arith.constant 0 : index
      %c0_30 = arith.constant 0 : index
      %52 = vector.load %arg6[%c0_29, %c0_30] : memref<8x1xf32, #tpu.memory_space<vmem>>, vector<8x1xf32>
      tpu.vector_store %arg6[%c0_29, %c0_30], %51 {strides = array<i32>} : memref<8x1xf32, #tpu.memory_space<vmem>>, vector<8x1xf32>,
      %c0_31 = arith.constant 0 : index
      %c0_32 = arith.constant 0 : index
      %53 = vector.load %arg5[%c0_31, %c0_32] : memref<8x1xf32, #tpu.memory_space<vmem>>, vector<8x1xf32>
      tpu.vector_store %arg5[%c0_31, %c0_32], %40 {strides = array<i32>} : memref<8x1xf32, #tpu.memory_space<vmem>>, vector<8x1xf32>,
    } else {
    }
    %20 = arith.extui %16 : i1 to i32
    %c0_i32_7 = arith.constant 0 : i32
    %21 = arith.cmpi ne, %20, %c0_i32_7 : i32
    scf.if %21 {
      %c128_i32_21 = arith.constant 128 : i32
      %37 = arith.muli %arg1, %c128_i32_21 : i32
      %c32_i32 = arith.constant 32 : i32
      %38 = arith.subi %c32_i32, %37 : i32
      %39 = vector.broadcast %38 : i32 to vector<8x128xi32>
      %40 = arith.cmpi slt, %5, %39 : vector<8x128xi32>
      %cst_22 = arith.constant 0xFF800000 : f32
      %41 = vector.broadcast %cst_22 : f32 to vector<8x128xf32>
      %42 = arith.select %40, %15, %41 : vector<8x128xi1>, vector<8x128xf32>
      %cst_23 = arith.constant dense<0xFF800000> : vector<8xf32>
      %43 = vector.multi_reduction <maximumf>, %42, %cst_23 [1] : vector<8x128xf32> to vector<8xf32>
      %44 = vector.shape_cast %43 : vector<8xf32> to vector<8x1xf32>
      %c0_24 = arith.constant 0 : index
      %c0_25 = arith.constant 0 : index
      %45 = vector.load %arg5[%c0_24, %c0_25] : memref<8x1xf32, #tpu.memory_space<vmem>>, vector<8x1xf32>
      %46 = arith.maximumf %45, %44 : vector<8x1xf32>
      %47 = vector.broadcast %46 : vector<8x1xf32> to vector<8x128xf32>
      %48 = arith.subf %42, %47 : vector<8x128xf32>
      %49 = math.exp %48 : vector<8x128xf32>
      %c0_26 = arith.constant 0 : index
      %c0_27 = arith.constant 0 : index
      %50 = vector.load %arg5[%c0_26, %c0_27] : memref<8x1xf32, #tpu.memory_space<vmem>>, vector<8x1xf32>
      %51 = arith.subf %50, %46 : vector<8x1xf32>
      %52 = math.exp %51 : vector<8x1xf32>
      %c0_28 = arith.constant 0 : index
      %c0_29 = arith.constant 0 : index
      %53 = vector.load %arg6[%c0_28, %c0_29] : memref<8x1xf32, #tpu.memory_space<vmem>>, vector<8x1xf32>
      %54 = arith.mulf %52, %53 : vector<8x1xf32>
      %cst_30 = arith.constant dense<0.000000e+00> : vector<8xf32>
      %55 = vector.multi_reduction <add>, %49, %cst_30 [1] : vector<8x128xf32> to vector<8xf32>
      %56 = vector.shape_cast %55 : vector<8xf32> to vector<8x1xf32>
      %57 = arith.addf %54, %56 : vector<8x1xf32>
      %c0_31 = arith.constant 0 : index
      %c0_32 = arith.constant 0 : index
      %58 = vector.load %arg6[%c0_31, %c0_32] : memref<8x1xf32, #tpu.memory_space<vmem>>, vector<8x1xf32>
      tpu.vector_store %arg6[%c0_31, %c0_32], %57 {strides = array<i32>} : memref<8x1xf32, #tpu.memory_space<vmem>>, vector<8x1xf32>,
      %c0_33 = arith.constant 0 : index
      %c0_34 = arith.constant 0 : index
      %59 = vector.load %arg5[%c0_33, %c0_34] : memref<8x1xf32, #tpu.memory_space<vmem>>, vector<8x1xf32>
      tpu.vector_store %arg5[%c0_33, %c0_34], %46 {strides = array<i32>} : memref<8x1xf32, #tpu.memory_space<vmem>>, vector<8x1xf32>,
    } else {
    }
    %c0_8 = arith.constant 0 : index
    %c0_9 = arith.constant 0 : index
    %22 = vector.load %arg7[%c0_8, %c0_9] : memref<8x1xf32, #tpu.memory_space<vmem>>, vector<8x1xf32>
    %cst_10 = arith.constant dense<0.000000e+00> : vector<8xf32>
    %23 = vector.multi_reduction <add>, %3, %cst_10 [1] : vector<8x128xf32> to vector<8xf32>
    %24 = vector.shape_cast %23 : vector<8xf32> to vector<8x1xf32>
    %25 = arith.addf %22, %24 : vector<8x1xf32>
    %c0_11 = arith.constant 0 : index
    %c0_12 = arith.constant 0 : index
    %26 = vector.load %arg7[%c0_11, %c0_12] : memref<8x1xf32, #tpu.memory_space<vmem>>, vector<8x1xf32>
    tpu.vector_store %arg7[%c0_11, %c0_12], %25 {strides = array<i32>} : memref<8x1xf32, #tpu.memory_space<vmem>>, vector<8x1xf32>,
    %c0_13 = arith.constant 0 : index
    %c0_14 = arith.constant 0 : index
    %27 = vector.load %arg8[%c0_13, %c0_14] : memref<8x1xf32, #tpu.memory_space<vmem>>, vector<8x1xf32>
    %cst_15 = arith.constant 0.000000e+00 : f32
    %28 = vector.broadcast %cst_15 : f32 to vector<8x128xf32>
    %29 = arith.select %10, %3, %28 : vector<8x128xi1>, vector<8x128xf32>
    %cst_16 = arith.constant dense<0.000000e+00> : vector<8xf32>
    %30 = vector.multi_reduction <add>, %29, %cst_16 [1] : vector<8x128xf32> to vector<8xf32>
    %31 = vector.shape_cast %30 : vector<8xf32> to vector<8x1xf32>
    %32 = arith.addf %27, %31 : vector<8x1xf32>
    %c0_17 = arith.constant 0 : index
    %c0_18 = arith.constant 0 : index
    %33 = vector.load %arg8[%c0_17, %c0_18] : memref<8x1xf32, #tpu.memory_space<vmem>>, vector<8x1xf32>
    tpu.vector_store %arg8[%c0_17, %c0_18], %32 {strides = array<i32>} : memref<8x1xf32, #tpu.memory_space<vmem>>, vector<8x1xf32>,
    %c0_i32_19 = arith.constant 0 : i32
    %34 = arith.cmpi eq, %arg1, %c0_i32_19 : i32
    %35 = arith.extui %34 : i1 to i32
    %c0_i32_20 = arith.constant 0 : i32
    %36 = arith.cmpi ne, %35, %c0_i32_20 : i32
    scf.if %36 {
      %c0_21 = arith.constant 0 : index
      %c0_22 = arith.constant 0 : index
      %37 = vector.load %arg5[%c0_21, %c0_22] : memref<8x1xf32, #tpu.memory_space<vmem>>, vector<8x1xf32>
      %c0_23 = arith.constant 0 : index
      %c0_24 = arith.constant 0 : index
      %38 = vector.load %arg6[%c0_23, %c0_24] : memref<8x1xf32, #tpu.memory_space<vmem>>, vector<8x1xf32>
      %39 = math.log %38 : vector<8x1xf32>
      %40 = arith.addf %37, %39 : vector<8x1xf32>
      %c0_25 = arith.constant 0 : index
      %c0_26 = arith.constant 0 : index
      %41 = vector.load %arg7[%c0_25, %c0_26] : memref<8x1xf32, #tpu.memory_space<vmem>>, vector<8x1xf32>
      %cst_27 = arith.constant 3.000000e+01 : f32
      %42 = vector.broadcast %cst_27 : f32 to vector<8x1xf32>
      %43 = arith.mulf %42, %41 : vector<8x1xf32>
      %cst_28 = arith.constant 1.050000e+01 : f32
      %44 = vector.broadcast %cst_28 : f32 to vector<8x1xf32>
      %45 = arith.subf %43, %44 : vector<8x1xf32>
      %c0_29 = arith.constant 0 : index
      %c0_30 = arith.constant 0 : index
      %46 = vector.load %arg8[%c0_29, %c0_30] : memref<8x1xf32, #tpu.memory_space<vmem>>, vector<8x1xf32>
      %cst_31 = arith.constant 3.000000e+01 : f32
      %47 = vector.broadcast %cst_31 : f32 to vector<8x1xf32>
      %48 = arith.mulf %47, %46 : vector<8x1xf32>
      %cst_32 = arith.constant 1.050000e+01 : f32
      %49 = vector.broadcast %cst_32 : f32 to vector<8x1xf32>
      %50 = arith.subf %48, %49 : vector<8x1xf32>
      %cst_33 = arith.constant 3.125000e-03 : f32
      %51 = vector.broadcast %cst_33 : f32 to vector<8x1xf32>
      %52 = arith.mulf %51, %45 : vector<8x1xf32>
      %cst_34 = arith.constant 0.899999976 : f32
      %53 = vector.broadcast %cst_34 : f32 to vector<8x1xf32>
      %54 = arith.mulf %53, %50 : vector<8x1xf32>
      %55 = arith.addf %52, %54 : vector<8x1xf32>
      %56 = arith.subf %40, %55 : vector<8x1xf32>
      %c0_35 = arith.constant 0 : index
      %c0_36 = arith.constant 0 : index
      %57 = vector.load %arg4[%c0_35, %c0_36] : memref<8x1xf32, #tpu.memory_space<vmem>>, vector<8x1xf32>
      tpu.vector_store %arg4[%c0_35, %c0_36], %56 {strides = array<i32>} : memref<8x1xf32, #tpu.memory_space<vmem>>, vector<8x1xf32>,
    } else {
    }
    return
  }
  func.func @transform_0(%arg0: i32, %arg1: i32) -> (i32, i32) {
    %c0_i32 = arith.constant 0 : i32
    return %arg0, %arg1 : i32, i32
  }
  func.func @transform_1(%arg0: i32, %arg1: i32) -> (i32, i32) {
    %c0_i32 = arith.constant 0 : i32
    %c0_i32_0 = arith.constant 0 : i32
    return %arg0, %c0_i32 : i32, i32
  }
  func.func @transform_2(%arg0: i32, %arg1: i32) -> (i32, i32) {
    %c0_i32 = arith.constant 0 : i32
    %c0_i32_0 = arith.constant 0 : i32
    return %arg0, %c0_i32 : i32, i32
  }
}

</mosaic_0001>

<llo_original>
// kernel: tpu_custom_call.1
$region0: #{tpu_custom_call.1}
  #allocation0 [shape = 'u32[]', space=smem, size = 0x4, offset = 0x4, fixed_abs, tag = 'smem constant byte address 0x4 - core index']
  #allocation1 [shape = 'u32[72,128]{1,0:T(1,128)}', space=vmem, size = 0x9000, scoped, tag = 'internal scratch']
  #allocation2 [shape = 'f32[8,1]{1,0:T(8,128)}', space=vmem, size = 0x1000, scoped, tag = 'scratch operand']
  #allocation3 [shape = 'f32[8,1]{1,0:T(8,128)}', space=vmem, size = 0x1000, scoped, tag = 'scratch operand']
  #allocation4 [shape = 'f32[8,1]{1,0:T(8,128)}', space=vmem, size = 0x1000, scoped, tag = 'scratch operand']
  #allocation5 [shape = 'f32[8,1]{1,0:T(8,128)}', space=vmem, size = 0x1000, scoped, tag = 'scratch operand']
  %s0 = inlined_call_operand.vmem [shape: f32[8,128], index: 0, kind: input, shape index: {}]
  %s1 = inlined_call_operand.vmem [shape: s32[8,1], index: 1, kind: input, shape index: {}]
  %s2 = inlined_call_operand.vmem [shape: f32[8,1], index: 2, kind: output, shape index: {}]
  %s3 = sld [smem:[#allocation0]]
  $region34: #{tpu_custom_call.1} parent=0
    _
  %s5 = ssub.s32 1, %s3
  %s6 = scalar_select 0, %s5, %s3
  // Predicated region
  $region2: #{tpu_custom_call.1} parent=0 // pred_check
    _
  $region3: #{tpu_custom_call.1} parent=0 // pred_check_branch
    %8 = sbr.rel (0) target = $region5
  $region4: #{tpu_custom_call.1} parent=0 // pred_region
    _
  $region5: #{tpu_custom_call.1} parent=0 // pred_fallthru
    _
  // Predicated region
  $region6: #{tpu_custom_call.1} parent=0 // pred_check
    _
  $region7: #{tpu_custom_call.1} parent=0 // pred_check_branch
    %10 = sbr.rel (0) target = $region9
  $region8: #{tpu_custom_call.1} parent=0 // pred_region
    _
  $region9: #{tpu_custom_call.1} parent=0 // pred_fallthru
    _
  %p11 = scmp.eq.s32.totalorder 0, 0
  // Predicated region
  $region10: #{tpu_custom_call.1} parent=0 // pred_check
    %p12 = pneg %p11
  $region11: #{tpu_custom_call.1} parent=0 // pred_check_branch
    %14 = sbr.rel (%p12) target = $region13
  $region12: #{tpu_custom_call.1} parent=0 // pred_region
    %vm15 = vcmask 7168
    %16 = vst.msk [vmem:[#allocation2] sm:$0xff] %vm15, -inf
    %17 = vst.msk [vmem:[#allocation3] sm:$0xff] %vm15, 0.0
    %18 = vst.msk [vmem:[#allocation4] sm:$0xff] %vm15, 0.0
    %19 = vst.msk [vmem:[#allocation5] sm:$0xff] %vm15, 0.0
  $region13: #{tpu_custom_call.1} parent=0 // pred_fallthru
    _
  %v20 = vld [vmem:[%s0] sm:$0xff]
  %v21 = vld [vmem:[%s1] sm:$0xff]
  %v22 = vlaneseq
  %v23 = vand.u32 %v22, 127
  %s24 = smul.u32 0, 128
  %v25 = vstv %s24
  %v26 = vsub.s32 %v21, %v25
  %27 = vset.pattern.permute.xlu0 0
  %28 = vperm.xlu0 %27, %v26
  %v29 = vpop.permute.xlu0 %28
  %vm30 = vcmp.eq.s32.totalorder %v23, %v29
  %v31 = vmul.f32 %v20, 30.0
  %v32 = vsub.f32 %v31, 10.5
  %v33 = vsel %vm30, %v32, %v31
  %p34 = scmp.ne.s32.totalorder 0, 0
  // Predicated region
  $region14: #{tpu_custom_call.1} parent=0 // pred_check
    %p35 = pneg %p34
  $region15: #{tpu_custom_call.1} parent=0 // pred_check_branch
    %37 = sbr.rel (%p35) target = $region17
  $region16: #{tpu_custom_call.1} parent=0 // pred_region
    %38 = vmax.xlane.f32.xlu0 %v33
    %v39 = vpop.xlane.xlu0 %38
    %v40 = vld [vmem:[#allocation2] sm:$0xff]
    %v41 = vmax.f32 %v40, %v39
    %43 = vset.pattern.permute.xlu0 0
    %44 = vperm.xlu0 %43, %v41
    %v45 = vpop.permute.xlu0 %44
    %v47 = vsub.f32 %v33, %v45
    %v48 = vmul.f32 %v47, 1.442695
    %v49 = vpow.pop %v48
    %v50 = vsub.f32 %v40, %v41
    %v51 = vmul.f32 %v50, 1.442695
    %v52 = vpow.pop %v51
    %v53 = vld [vmem:[#allocation3] sm:$0xff]
    %v54 = vmul.f32 %v52, %v53
    %55 = vadd.xlane.f32.xlu0 %v49
    %v56 = vpop.xlane.xlu0 %55
    %v57 = vadd.f32 %v54, %v56
    %vm58 = vcmask 7168
    %59 = vst.msk [vmem:[#allocation3] sm:$0xff] %vm58, %v57
    %60 = vst.msk [vmem:[#allocation2] sm:$0xff] %vm58, %v41
  $region17: #{tpu_custom_call.1} parent=0 // pred_fallthru
    _
  // Predicated region
  $region18: #{tpu_custom_call.1} parent=0 // pred_check
    %p61 = pneg %p11
  $region19: #{tpu_custom_call.1} parent=0 // pred_check_branch
    %63 = sbr.rel (%p61) target = $region21
  $region20: #{tpu_custom_call.1} parent=0 // pred_region
    %s64 = ssub.s32 32, %s24
    %v65 = vstv %s64
    %vm66 = vcmp.lt.s32.totalorder %v23, %v65
    %v67 = vsel %vm66, %v33, -inf
    %68 = vmax.xlane.f32.xlu0 %v67
    %v69 = vpop.xlane.xlu0 %68
    %v70 = vld [vmem:[#allocation2] sm:$0xff]
    %v71 = vmax.f32 %v70, %v69
    %73 = vset.pattern.permute.xlu0 0
    %74 = vperm.xlu0 %73, %v71
    %v75 = vpop.permute.xlu0 %74
    %v77 = vsub.f32 %v67, %v75
    %v78 = vmul.f32 %v77, 1.442695
    %v79 = vpow.pop %v78
    %v80 = vsub.f32 %v70, %v71
    %v81 = vmul.f32 %v80, 1.442695
    %v82 = vpow.pop %v81
    %v83 = vld [vmem:[#allocation3] sm:$0xff]
    %v84 = vmul.f32 %v82, %v83
    %85 = vadd.xlane.f32.xlu0 %v79
    %v86 = vpop.xlane.xlu0 %85
    %v87 = vadd.f32 %v84, %v86
    %vm88 = vcmask 7168
    %89 = vst.msk [vmem:[#allocation3] sm:$0xff] %vm88, %v87
    %90 = vst.msk [vmem:[#allocation2] sm:$0xff] %vm88, %v71
  $region21: #{tpu_custom_call.1} parent=0 // pred_fallthru
    _
  %v91 = vld [vmem:[#allocation4] sm:$0xff]
  %92 = vadd.xlane.f32.xlu0 %v20
  %v93 = vpop.xlane.xlu0 %92
  %v94 = vadd.f32 %v91, %v93
  %vm95 = vcmask 7168
  %96 = vst.msk [vmem:[#allocation4] sm:$0xff] %vm95, %v94
  %v97 = vld [vmem:[#allocation5] sm:$0xff]
  %v98 = vsel %vm30, %v20, 0.0
  %99 = vadd.xlane.f32.xlu0 %v98
  %v100 = vpop.xlane.xlu0 %99
  %v101 = vadd.f32 %v97, %v100
  %102 = vst.msk [vmem:[#allocation5] sm:$0xff] %vm95, %v101
  // Predicated region
  $region22: #{tpu_custom_call.1} parent=0 // pred_check
    %p103 = pneg %p11
  $region23: #{tpu_custom_call.1} parent=0 // pred_check_branch
    %105 = sbr.rel (%p103) target = $region25
  $region24: #{tpu_custom_call.1} parent=0 // pred_region
    %v106 = vld [vmem:[#allocation2] sm:$0xff]
    %v107 = vld [vmem:[#allocation3] sm:$0xff]
    %v108 = vlog2.pop %v107
    %v109 = vmul.f32 %v108, 0.6931472
    %v110 = vadd.f32 %v106, %v109
    %v111 = vld [vmem:[#allocation4] sm:$0xff]
    %v112 = vmul.f32 %v111, 30.0
    %v113 = vsub.f32 %v112, 10.5
    %v114 = vld [vmem:[#allocation5] sm:$0xff]
    %v115 = vmul.f32 %v114, 30.0
    %v116 = vsub.f32 %v115, 10.5
    %v117 = vmul.f32 %v113, 0.003125
    %v118 = vmul.f32 %v116, 0.9
    %v119 = vadd.f32 %v117, %v118
    %v120 = vsub.f32 %v110, %v119
    %121 = vst.msk [vmem:[%s2] sm:$0xff] %vm95, %v120
  $region25: #{tpu_custom_call.1} parent=0 // pred_fallthru
    _
  // Predicated region
  $region26: #{tpu_custom_call.1} parent=0 // pred_check
    _
  $region27: #{tpu_custom_call.1} parent=0 // pred_check_branch
    %123 = sbr.rel (0) target = $region29
  $region28: #{tpu_custom_call.1} parent=0 // pred_region
    _
  $region29: #{tpu_custom_call.1} parent=0 // pred_fallthru
    _
  // Predicated region
  $region30: #{tpu_custom_call.1} parent=0 // pred_check
    _
  $region31: #{tpu_custom_call.1} parent=0 // pred_check_branch
    %125 = sbr.rel (0) target = $region33
  $region32: #{tpu_custom_call.1} parent=0 // pred_region
    _
  $region33: #{tpu_custom_call.1} parent=0 // pred_fallthru
    _

</llo_original>
